<compile_context>
chip_gen: v7x
topology: tpu7x:2x2x1
jax: 0.10.0
libtpu: 0.0.40
codegen_flags: <defaults>
</compile_context>

<pallas_src>
import functools
import math

import numpy as np
import jax
import jax.numpy as jnp
from jax.experimental import pallas as pl
from jax.experimental.pallas import tpu as pltpu


# ----------------------------- Pallas kernel ---------------------------------

def _pos_embed_sine_kernel(mask_ref, inv_ref, out_ref, *,
                           num_pos_feats, normalize, scale, eps):
    P = num_pos_feats
    B, L = mask_ref.shape
    mask = mask_ref[...]                                     # (B, L) f32, values 0/1

    # Upper-triangular 0/1 matrix already broadcast across the P feature lanes,
    # built in-kernel from iotas (no HBM constant, no data-dependent layout):
    #   tri[j, l*P + p] = 1  iff  j <= l        (j*P <= q  <=>  j <= q // P)
    j = jax.lax.broadcasted_iota(jnp.int32, (L, L * P), 0)
    q = jax.lax.broadcasted_iota(jnp.int32, (L, L * P), 1)
    tri = (j * P <= q).astype(jnp.float32).astype(jnp.bfloat16)   # (L, L*P)

    # Fused cumsum + broadcast over P in one MXU matmul:
    #   xe[b, l*P + p] = sum_{j <= l} mask[b, j]
    # 0/1 operands are exact in bf16; accumulation is f32, so the cumsum is exact.
    xe = jnp.dot(mask.astype(jnp.bfloat16), tri,
                 preferred_element_type=jnp.float32)         # (B, L*P) f32

    if normalize:  # static Python flag
        # x_embed[:, -1] is just the total valid count per row.
        denom = jnp.sum(mask, axis=-1, keepdims=True) + eps  # (B, 1)
        xe = xe * (scale / denom)

    # angle = x_embed / dim_t  (VPU broadcast-multiply against the (1, L*P) 1/dim_t row)
    angle = xe * inv_ref[...]                                # (B, L*P)

    # Interleaved sin/cos as ONE phase-shifted sine: since P is even, the parity of the
    # flat index q = l*P + p equals the parity of p, so
    #   out[.., q] = sin(angle + (q % 2) * pi/2)
    # reproduces stack((sin(0::2), cos(1::2))).flatten(2) exactly, with half the EUP work.
    parity = jax.lax.broadcasted_iota(jnp.int32, (1, L * P), 1) % 2
    phase = parity.astype(jnp.float32) * (math.pi / 2.0)     # (1, L*P)
    out_ref[...] = jnp.sin(angle + phase).astype(out_ref.dtype)


# --------------------------- cached constant row -------------------------------

@functools.lru_cache(maxsize=None)
def _inv_dim_t_row(seq_len, num_pos_feats, temperature):
    """(1, L*P) row with 1/dim_t tiled L times; built once per (L, P, temperature)."""
    p = np.arange(num_pos_feats, dtype=np.float32)
    dim_t = np.asarray(temperature, dtype=np.float32) ** (
        2.0 * np.floor(p / 2.0) / np.float32(num_pos_feats))
    inv = (1.0 / dim_t).astype(np.float32)                   # (P,)
    row = np.tile(inv, seq_len)[None, :]                     # (1, L*P)
    return jnp.asarray(row)


# ------------------------------ JAX wrapper -----------------------------------

def position_embedding_sine(x, mask, *, num_pos_feats=64, temperature=10000,
                            normalize=False, scale=None):
    """Pallas equivalent of PositionEmbeddingSine.forward(x, mask).

    x:    (B, L, d)  -- only its dtype is used (as in the PyTorch module)
    mask: (B, L)     -- 1/True = valid
    returns (B, L, num_pos_feats) in x.dtype
    """
    if scale is not None and normalize is False:
        raise ValueError("normalize should be True if scale is passed")
    if scale is None:
        scale = 2 * math.pi
    assert num_pos_feats % 2 == 0, "num_pos_feats must be even"

    B, L = mask.shape
    P = num_pos_feats

    inv_row = _inv_dim_t_row(L, P, float(temperature))       # (1, L*P), cached
    mask_f = mask.astype(jnp.float32)

    out_flat = pl.pallas_call(
        functools.partial(_pos_embed_sine_kernel, num_pos_feats=P,
                          normalize=bool(normalize), scale=float(scale), eps=1e-6),
        out_shape=jax.ShapeDtypeStruct((B, L * P), x.dtype),
        grid=(1,),
        in_specs=[pl.BlockSpec((B, L), lambda i: (0, 0)),
                  pl.BlockSpec((1, L * P), lambda i: (0, 0))],
        out_specs=pl.BlockSpec((B, L * P), lambda i: (0, 0)),
        compiler_params=pltpu.CompilerParams(
            dimension_semantics=("arbitrary",)),
    )(mask_f, inv_row)

    return out_flat.reshape(B, L, P)


# --------------------------- pure-JAX reference --------------------------------

def reference(x, mask, *, num_pos_feats=64, temperature=10000,
              normalize=False, scale=None):
    if scale is None:
        scale = 2 * math.pi
    B, L = mask.shape
    x_embed = jnp.cumsum(mask.astype(jnp.float32), axis=1)
    if normalize:
        eps = 1e-6
        x_embed = x_embed / (x_embed[:, -1:] + eps) * scale
    dim_t = jnp.arange(num_pos_feats, dtype=jnp.float32)
    dim_t = temperature ** (2.0 * jnp.floor(dim_t / 2.0) / num_pos_feats)
    pos_x = x_embed[:, :, None] / dim_t
    pos_x = jnp.stack((jnp.sin(pos_x[:, :, 0::2]), jnp.cos(pos_x[:, :, 1::2])),
                      axis=3)
    return pos_x.reshape(B, L, num_pos_feats).astype(x.dtype)


# ------------------------------------ main -------------------------------------

if __name__ == "__main__":
    B, L, d_model, P = 2, 16, 32, 64

    key = jax.random.PRNGKey(0)
    x = jax.random.normal(key, (B, L, d_model), jnp.float32)

    # mask: 1 = valid. Batch 0 fully valid, batch 1 has trailing padding.
    valid_lens = jnp.array([L, 10])
    mask = (jnp.arange(L)[None, :] < valid_lens[:, None]).astype(jnp.float32)

    # normalize=False (module default)
    out = position_embedding_sine(x, mask, num_pos_feats=P)
    out = jax.block_until_ready(out)
    ref = reference(x, mask, num_pos_feats=P)
    assert out.shape == (B, L, P)
    assert out.dtype == x.dtype
    assert jnp.allclose(out, ref, atol=1e-4, rtol=1e-4), "mismatch (normalize=False)"

    # normalize=True path
    out_n = position_embedding_sine(x, mask, num_pos_feats=P, normalize=True)
    out_n = jax.block_until_ready(out_n)
    ref_n = reference(x, mask, num_pos_feats=P, normalize=True)
    assert jnp.allclose(out_n, ref_n, atol=1e-4, rtol=1e-4), "mismatch (normalize=True)"

    print("KERNEL_OK")
</pallas_src>

<mosaic_0001>
module attributes {stable_mosaic.version = 11 : i64} {
  func.func @_pos_embed_sine_kernel(%arg0: i32, %arg1: memref<2x16xf32, #tpu.memory_space<vmem>>, %arg2: memref<1x1024xf32, #tpu.memory_space<vmem>>, %arg3: memref<2x1024xf32, #tpu.memory_space<vmem>>) attributes {dimension_semantics = [#tpu.dimension_semantics<arbitrary>], iteration_bounds = array<i64: 1>, scalar_prefetch = 0 : i64, scratch_operands = 0 : i64, tpu.core_type = #tpu.core_type<tc>, window_params = [{pipeline_mode = #tpu.pipeline_mode<synchronous>, transform_indices = @transform_0, window_bounds = array<i64: 2, 16>}, {pipeline_mode = #tpu.pipeline_mode<synchronous>, transform_indices = @transform_1, window_bounds = array<i64: 1, 1024>}, {pipeline_mode = #tpu.pipeline_mode<synchronous>, transform_indices = @transform_2, window_bounds = array<i64: 2, 1024>}]} {
    %c0 = arith.constant 0 : index
    %c0_0 = arith.constant 0 : index
    %0 = vector.load %arg1[%c0, %c0_0] : memref<2x16xf32, #tpu.memory_space<vmem>>, vector<2x16xf32>
    %1 = tpu.iota {dimensions = array<i32: 0>} : vector<16x1024xi32>
    %2 = tpu.iota {dimensions = array<i32: 1>} : vector<16x1024xi32>
    %c64_i32 = arith.constant 64 : i32
    %3 = vector.broadcast %c64_i32 : i32 to vector<16x1024xi32>
    %4 = arith.muli %1, %3 : vector<16x1024xi32>
    %5 = arith.cmpi sle, %4, %2 : vector<16x1024xi32>
    %6 = arith.extui %5 : vector<16x1024xi1> to vector<16x1024xi32>
    %7 = arith.sitofp %6 : vector<16x1024xi32> to vector<16x1024xf32>
    %8 = arith.truncf %7 : vector<16x1024xf32> to vector<16x1024xbf16>
    %9 = arith.truncf %0 : vector<2x16xf32> to vector<2x16xbf16>
    %cst = arith.constant dense<0.000000e+00> : vector<2x1024xf32>
    %10 = tpu.matmul %9, %8, %cst {dimension_numbers = #tpu.dot_dimension_numbers<[1], [0], [0], [1], [0, 0, 1, 1], [], []>} : vector<2x16xbf16>, vector<16x1024xbf16>, vector<2x1024xf32> -> vector<2x1024xf32>
    %c0_1 = arith.constant 0 : index
    %c0_2 = arith.constant 0 : index
    %11 = vector.load %arg2[%c0_1, %c0_2] : memref<1x1024xf32, #tpu.memory_space<vmem>>, vector<1x1024xf32>
    %12 = vector.broadcast %11 : vector<1x1024xf32> to vector<2x1024xf32>
    %13 = arith.mulf %10, %12 : vector<2x1024xf32>
    %14 = tpu.iota {dimensions = array<i32: 1>} : vector<1x1024xi32>
    %c2_i32 = arith.constant 2 : i32
    %c0_i32 = arith.constant 0 : i32
    %15 = arith.cmpi eq, %c2_i32, %c0_i32 : i32
    %c1_i32 = arith.constant 1 : i32
    %16 = arith.select %15, %c1_i32, %c2_i32 : i32
    %17 = vector.broadcast %16 : i32 to vector<1x1024xi32>
    %18 = arith.remsi %14, %17 : vector<1x1024xi32>
    %c0_i32_3 = arith.constant 0 : i32
    %19 = vector.broadcast %c0_i32_3 : i32 to vector<1x1024xi32>
    %20 = arith.cmpi ne, %18, %19 : vector<1x1024xi32>
    %c0_i32_4 = arith.constant 0 : i32
    %21 = vector.broadcast %c0_i32_4 : i32 to vector<1x1024xi32>
    %22 = arith.cmpi slt, %18, %21 : vector<1x1024xi32>
    %c0_i32_5 = arith.constant 0 : i32
    %23 = arith.cmpi slt, %16, %c0_i32_5 : i32
    %24 = vector.broadcast %23 : i1 to vector<1x1024xi1>
    %25 = vector.broadcast %24 : vector<1x1024xi1> to vector<1x1024xi1>
    %26 = arith.xori %22, %25 : vector<1x1024xi1>
    %27 = arith.andi %26, %20 : vector<1x1024xi1>
    %28 = vector.broadcast %16 : i32 to vector<1x1024xi32>
    %29 = arith.addi %18, %28 : vector<1x1024xi32>
    %30 = arith.select %27, %29, %18 : vector<1x1024xi1>, vector<1x1024xi32>
    %31 = arith.sitofp %30 : vector<1x1024xi32> to vector<1x1024xf32>
    %cst_6 = arith.constant 1.57079637 : f32
    %32 = vector.broadcast %cst_6 : f32 to vector<1x1024xf32>
    %33 = arith.mulf %31, %32 : vector<1x1024xf32>
    %34 = vector.broadcast %33 : vector<1x1024xf32> to vector<2x1024xf32>
    %35 = arith.addf %13, %34 : vector<2x1024xf32>
    %36 = math.sin %35 : vector<2x1024xf32>
    %c0_7 = arith.constant 0 : index
    %c0_8 = arith.constant 0 : index
    %37 = vector.load %arg3[%c0_7, %c0_8] : memref<2x1024xf32, #tpu.memory_space<vmem>>, vector<2x1024xf32>
    tpu.vector_store %arg3[%c0_7, %c0_8], %36 {strides = array<i32>} : memref<2x1024xf32, #tpu.memory_space<vmem>>, vector<2x1024xf32>,
    return
  }
  func.func @transform_0(%arg0: i32) -> (i32, i32) {
    %c0_i32 = arith.constant 0 : i32
    %c0_i32_0 = arith.constant 0 : i32
    %c0_i32_1 = arith.constant 0 : i32
    return %c0_i32, %c0_i32_0 : i32, i32
  }
  func.func @transform_1(%arg0: i32) -> (i32, i32) {
    %c0_i32 = arith.constant 0 : i32
    %c0_i32_0 = arith.constant 0 : i32
    %c0_i32_1 = arith.constant 0 : i32
    return %c0_i32, %c0_i32_0 : i32, i32
  }
  func.func @transform_2(%arg0: i32) -> (i32, i32) {
    %c0_i32 = arith.constant 0 : i32
    %c0_i32_0 = arith.constant 0 : i32
    %c0_i32_1 = arith.constant 0 : i32
    return %c0_i32, %c0_i32_0 : i32, i32
  }
}

</mosaic_0001>

<llo_original>
// kernel: tpu_custom_call.1
$region0: #{tpu_custom_call.1}
  #allocation0 [shape = 'u32[]', space=smem, size = 0x4, offset = 0x4, fixed_abs, tag = 'smem constant byte address 0x4 - core index']
  #allocation1 [shape = 'u32[144,128]{1,0:T(1,128)}', space=vmem, size = 0x12000, scoped, tag = 'internal scratch']
  %s0 = inlined_call_operand.hbm [shape: f32[2,16], index: 0, kind: input, shape index: {}]
  %s1 = inlined_call_operand.hbm [shape: f32[1,1024], index: 1, kind: input, shape index: {}]
  %s2 = inlined_call_operand.hbm [shape: f32[2,1024], index: 2, kind: output, shape index: {}]
  %s3 = sld [smem:[#allocation0]]
  $region26: #{tpu_custom_call.1} parent=0
    _
  %s5 = ssub.s32 1, %s3
  %s6 = scalar_select 0, %s5, %s3
  $region1: #{tpu_custom_call.1} parent=0
    #allocation2 [shape = 'u8[1024]{0}', space=vmem, size = 0x400, scoped, tag = 'input window, operand 0, single buffered']
    #allocation3 [shape = 's32[1]{0}', space=sflag, size = 0x4, scoped, tag = 'scoped memory for tpu_custom_call.1']
    #allocation4 [shape = 's32[1]{0}', space=sflag, size = 0x4, scoped, tag = 'scoped memory for tpu_custom_call.1']
    #allocation5 [shape = 'u8[4096]{0}', space=vmem, size = 0x1000, scoped, tag = 'input window, operand 1, single buffered']
    #allocation6 [shape = 's32[1]{0}', space=sflag, size = 0x4, scoped, tag = 'scoped memory for tpu_custom_call.1']
    #allocation7 [shape = 'u8[8192]{0}', space=vmem, size = 0x2000, scoped, tag = 'output window, operand 0, single buffered']
    %7 = vsyncpa [#allocation3], 0
    %8 = vsyncpa [#allocation6], 0
    %9 = vsyncpa [#allocation4], 0
    // Predicated region
    $region2: #{tpu_custom_call.1} parent=1 // pred_check
      _
    $region3: #{tpu_custom_call.1} parent=1 // pred_check_branch
      %11 = sbr.rel (0) target = $region5
    $region4: #{tpu_custom_call.1} parent=1 // pred_region
      %s13 = ssub.s32 32, 32
      %14 = vsyncadd [#allocation3], %s13
      %s16 = sshll.u32 [#allocation2], 4
      %s17 = int_to_ptr.vmem [resolvable:$true] %s16
      %19 = dma.hbm_to_vmem [thread:$0]  %s0, 32, %s17, [#allocation3]
    $region5: #{tpu_custom_call.1} parent=1 // pred_fallthru
      _
    // Predicated region
    $region6: #{tpu_custom_call.1} parent=1 // pred_check
      _
    $region7: #{tpu_custom_call.1} parent=1 // pred_check_branch
      %21 = sbr.rel (0) target = $region9
    $region8: #{tpu_custom_call.1} parent=1 // pred_region
      %s23 = ssub.s32 128, 128
      %24 = vsyncadd [#allocation6], %s23
      %s26 = sshll.u32 [#allocation5], 4
      %s27 = int_to_ptr.vmem [resolvable:$true] %s26
      %29 = dma.hbm_to_vmem [thread:$0]  %s1, 128, %s27, [#allocation6]
    $region9: #{tpu_custom_call.1} parent=1 // pred_fallthru
      _
    // Predicated region
    $region10: #{tpu_custom_call.1} parent=1 // pred_check
      _
    $region11: #{tpu_custom_call.1} parent=1 // pred_check_branch
      %31 = sbr.rel (0) target = $region13
    $region12: #{tpu_custom_call.1} parent=1 // pred_region
      %32 = dma.done [#allocation3], 32
    $region13: #{tpu_custom_call.1} parent=1 // pred_fallthru
      _
    // Predicated region
    $region14: #{tpu_custom_call.1} parent=1 // pred_check
      _
    $region15: #{tpu_custom_call.1} parent=1 // pred_check_branch
      %34 = sbr.rel (0) target = $region17
    $region16: #{tpu_custom_call.1} parent=1 // pred_region
      %35 = dma.done [#allocation6], 128
    $region17: #{tpu_custom_call.1} parent=1 // pred_fallthru
      _
    %v37 = vld [vmem:[#allocation2] sm:$0x3]
    %v38 = vlaneseq
    %v39 = vshrl.u32 %v38, 7
    %v40 = vadd.s32 %v39, 8
    %v41 = vlaneseq
    %v42 = vand.u32 %v41, 127
    %v43 = vadd.s32 %v42, 128
    %v44 = vadd.s32 %v42, 256
    %v45 = vadd.s32 %v42, 384
    %v46 = vadd.s32 %v42, 512
    %v47 = vadd.s32 %v42, 640
    %v48 = vadd.s32 %v42, 768
    %v49 = vadd.s32 %v42, 896
    %v50 = vmul.u32 %v39, 64
    %v51 = vmul.u32 %v40, 64
    %vm52 = vcmp.le.s32.totalorder %v50, %v42
    %vm53 = vcmp.le.s32.totalorder %v50, %v43
    %vm54 = vcmp.le.s32.totalorder %v50, %v44
    %vm55 = vcmp.le.s32.totalorder %v50, %v45
    %vm56 = vcmp.le.s32.totalorder %v50, %v46
    %vm57 = vcmp.le.s32.totalorder %v50, %v47
    %vm58 = vcmp.le.s32.totalorder %v50, %v48
    %vm59 = vcmp.le.s32.totalorder %v50, %v49
    %vm60 = vcmp.le.s32.totalorder %v51, %v42
    %vm61 = vcmp.le.s32.totalorder %v51, %v43
    %vm62 = vcmp.le.s32.totalorder %v51, %v44
    %vm63 = vcmp.le.s32.totalorder %v51, %v45
    %vm64 = vcmp.le.s32.totalorder %v51, %v46
    %vm65 = vcmp.le.s32.totalorder %v51, %v47
    %vm66 = vcmp.le.s32.totalorder %v51, %v48
    %vm67 = vcmp.le.s32.totalorder %v51, %v49
    %v68 = vsel %vm52, 1, 0
    %v69 = vsel %vm53, 1, 0
    %v70 = vsel %vm54, 1, 0
    %v71 = vsel %vm55, 1, 0
    %v72 = vsel %vm56, 1, 0
    %v73 = vsel %vm57, 1, 0
    %v74 = vsel %vm58, 1, 0
    %v75 = vsel %vm59, 1, 0
    %v76 = vsel %vm60, 1, 0
    %v77 = vsel %vm61, 1, 0
    %v78 = vsel %vm62, 1, 0
    %v79 = vsel %vm63, 1, 0
    %v80 = vsel %vm64, 1, 0
    %v81 = vsel %vm65, 1, 0
    %v82 = vsel %vm66, 1, 0
    %v83 = vsel %vm67, 1, 0
    %v84 = vcvt.s32.f32 %v68
    %v85 = vcvt.s32.f32 %v69
    %v86 = vcvt.s32.f32 %v70
    %v87 = vcvt.s32.f32 %v71
    %v88 = vcvt.s32.f32 %v72
    %v89 = vcvt.s32.f32 %v73
    %v90 = vcvt.s32.f32 %v74
    %v91 = vcvt.s32.f32 %v75
    %v92 = vcvt.s32.f32 %v76
    %v93 = vcvt.s32.f32 %v77
    %v94 = vcvt.s32.f32 %v78
    %v95 = vcvt.s32.f32 %v79
    %v96 = vcvt.s32.f32 %v80
    %v97 = vcvt.s32.f32 %v81
    %v98 = vcvt.s32.f32 %v82
    %v99 = vcvt.s32.f32 %v83
    %v100 = vpack.c.bf16 %v92, %v84
    %v101 = vpack.c.bf16 %v93, %v85
    %v102 = vpack.c.bf16 %v94, %v86
    %v103 = vpack.c.bf16 %v95, %v87
    %v104 = vpack.c.bf16 %v96, %v88
    %v105 = vpack.c.bf16 %v97, %v89
    %v106 = vpack.c.bf16 %v98, %v90
    %v107 = vpack.c.bf16 %v99, %v91
    %v108 = vpack.c.bf16 %v37, %v37
    %vm109 = vcmask 130048
    %v111 = vsel %vm109, %v108, 0
    %113 = vmatprep.subr.bf16.mxu0 %v101
    %114 = vmatpush1.bf16.msra.mxu0 %v100
    %115 = vmatprep.subr.bf16.mxu0 0
    %116 = vmatpush1.bf16.msra.mxu0 0
    %117 = vmatprep.subr.bf16.mxu0 0
    %118 = vmatpush1.bf16.msra.mxu0 0
    %119 = vmatprep.subr.bf16.mxu0 0
    %120 = vmatpush1.bf16.msra.mxu0 0
    %121 = vmatprep.subr.bf16.mxu0 0
    %122 = vmatpush1.bf16.msra.mxu0 0
    %123 = vmatprep.subr.bf16.mxu0 0
    %124 = vmatpush1.bf16.msra.mxu0 0
    %125 = vmatprep.subr.bf16.mxu0 0
    %126 = vmatpush1.bf16.msra.mxu0 0
    %127 = vmatprep.subr.bf16.mxu0 0
    %128 = vmatpush1.bf16.msra.mxu0 0
    %129 = vmatprep.subr.bf16.mxu0 0
    %130 = vmatpush1.bf16.msra.mxu0 0
    %131 = vmatprep.subr.bf16.mxu0 0
    %132 = vmatpush1.bf16.msra.mxu0 0
    %133 = vmatprep.subr.bf16.mxu0 0
    %134 = vmatpush1.bf16.msra.mxu0 0
    %135 = vmatprep.subr.bf16.mxu0 0
    %136 = vmatpush1.bf16.msra.mxu0 0
    %137 = vmatprep.subr.bf16.mxu0 0
    %138 = vmatpush1.bf16.msra.mxu0 0
    %139 = vmatprep.subr.bf16.mxu0 0
    %140 = vmatpush1.bf16.msra.mxu0 0
    %141 = vmatprep.subr.bf16.mxu0 0
    %142 = vmatpush1.bf16.msra.mxu0 0
    %143 = vmatprep.subr.bf16.mxu0 0
    %144 = vmatpush1.bf16.msra.mxu0 0
    %145 = vmatprep.mubr.bf16.mxu0 0
    %146 = vmatmul.mubr.bf16.gmra.mrb[0].mxu0 %v111
    %v147 = vpop.f32.mrb[0].mxu0
    %v148 = vadd.f32 0.0, %v147
    %v149 = vpop.f32.mrb[0].mxu0
    %v150 = vadd.f32 0.0, %v149
    %v151 = vpop.f32.mrb[0].mxu0
    %v152 = vpop.f32.mrb[0].mxu0
    %153 = vdwg.mxu0
    %154 = vmatprep.subr.bf16.mxu0 %v103
    %155 = vmatpush1.bf16.msra.mxu0 %v102
    %156 = vmatprep.subr.bf16.mxu0 0
    %157 = vmatpush1.bf16.msra.mxu0 0
    %158 = vmatprep.subr.bf16.mxu0 0
    %159 = vmatpush1.bf16.msra.mxu0 0
    %160 = vmatprep.subr.bf16.mxu0 0
    %161 = vmatpush1.bf16.msra.mxu0 0
    %162 = vmatprep.subr.bf16.mxu0 0
    %163 = vmatpush1.bf16.msra.mxu0 0
    %164 = vmatprep.subr.bf16.mxu0 0
    %165 = vmatpush1.bf16.msra.mxu0 0
    %166 = vmatprep.subr.bf16.mxu0 0
    %167 = vmatpush1.bf16.msra.mxu0 0
    %168 = vmatprep.subr.bf16.mxu0 0
    %169 = vmatpush1.bf16.msra.mxu0 0
    %170 = vmatprep.subr.bf16.mxu0 0
    %171 = vmatpush1.bf16.msra.mxu0 0
    %172 = vmatprep.subr.bf16.mxu0 0
    %173 = vmatpush1.bf16.msra.mxu0 0
    %174 = vmatprep.subr.bf16.mxu0 0
    %175 = vmatpush1.bf16.msra.mxu0 0
    %176 = vmatprep.subr.bf16.mxu0 0
    %177 = vmatpush1.bf16.msra.mxu0 0
    %178 = vmatprep.subr.bf16.mxu0 0
    %179 = vmatpush1.bf16.msra.mxu0 0
    %180 = vmatprep.subr.bf16.mxu0 0
    %181 = vmatpush1.bf16.msra.mxu0 0
    %182 = vmatprep.subr.bf16.mxu0 0
    %183 = vmatpush1.bf16.msra.mxu0 0
    %184 = vmatprep.subr.bf16.mxu0 0
    %185 = vmatpush1.bf16.msra.mxu0 0
    %186 = vmatprep.mubr.bf16.mxu0 0
    %187 = vmatmul.mubr.bf16.gmra.mrb[0].mxu0 %v111
    %v188 = vpop.f32.mrb[0].mxu0
    %v189 = vadd.f32 0.0, %v188
    %v190 = vpop.f32.mrb[0].mxu0
    %v191 = vadd.f32 0.0, %v190
    %v192 = vpop.f32.mrb[0].mxu0
    %v193 = vpop.f32.mrb[0].mxu0
    %194 = vdwg.mxu0
    %195 = vmatprep.subr.bf16.mxu0 %v105
    %196 = vmatpush1.bf16.msra.mxu0 %v104
    %197 = vmatprep.subr.bf16.mxu0 0
    %198 = vmatpush1.bf16.msra.mxu0 0
    %199 = vmatprep.subr.bf16.mxu0 0
    %200 = vmatpush1.bf16.msra.mxu0 0
    %201 = vmatprep.subr.bf16.mxu0 0
    %202 = vmatpush1.bf16.msra.mxu0 0
    %203 = vmatprep.subr.bf16.mxu0 0
    %204 = vmatpush1.bf16.msra.mxu0 0
    %205 = vmatprep.subr.bf16.mxu0 0
    %206 = vmatpush1.bf16.msra.mxu0 0
    %207 = vmatprep.subr.bf16.mxu0 0
    %208 = vmatpush1.bf16.msra.mxu0 0
    %209 = vmatprep.subr.bf16.mxu0 0
    %210 = vmatpush1.bf16.msra.mxu0 0
    %211 = vmatprep.subr.bf16.mxu0 0
    %212 = vmatpush1.bf16.msra.mxu0 0
    %213 = vmatprep.subr.bf16.mxu0 0
    %214 = vmatpush1.bf16.msra.mxu0 0
    %215 = vmatprep.subr.bf16.mxu0 0
    %216 = vmatpush1.bf16.msra.mxu0 0
    %217 = vmatprep.subr.bf16.mxu0 0
    %218 = vmatpush1.bf16.msra.mxu0 0
    %219 = vmatprep.subr.bf16.mxu0 0
    %220 = vmatpush1.bf16.msra.mxu0 0
    %221 = vmatprep.subr.bf16.mxu0 0
    %222 = vmatpush1.bf16.msra.mxu0 0
    %223 = vmatprep.subr.bf16.mxu0 0
    %224 = vmatpush1.bf16.msra.mxu0 0
    %225 = vmatprep.subr.bf16.mxu0 0
    %226 = vmatpush1.bf16.msra.mxu0 0
    %227 = vmatprep.mubr.bf16.mxu0 0
    %228 = vmatmul.mubr.bf16.gmra.mrb[0].mxu0 %v111
    %v229 = vpop.f32.mrb[0].mxu0
    %v230 = vadd.f32 0.0, %v229
    %v231 = vpop.f32.mrb[0].mxu0
    %v232 = vadd.f32 0.0, %v231
    %v233 = vpop.f32.mrb[0].mxu0
    %v234 = vpop.f32.mrb[0].mxu0
    %235 = vdwg.mxu0
    %236 = vmatprep.subr.bf16.mxu0 %v107
    %237 = vmatpush1.bf16.msra.mxu0 %v106
    %238 = vmatprep.subr.bf16.mxu0 0
    %239 = vmatpush1.bf16.msra.mxu0 0
    %240 = vmatprep.subr.bf16.mxu0 0
    %241 = vmatpush1.bf16.msra.mxu0 0
    %242 = vmatprep.subr.bf16.mxu0 0
    %243 = vmatpush1.bf16.msra.mxu0 0
    %244 = vmatprep.subr.bf16.mxu0 0
    %245 = vmatpush1.bf16.msra.mxu0 0
    %246 = vmatprep.subr.bf16.mxu0 0
    %247 = vmatpush1.bf16.msra.mxu0 0
    %248 = vmatprep.subr.bf16.mxu0 0
    %249 = vmatpush1.bf16.msra.mxu0 0
    %250 = vmatprep.subr.bf16.mxu0 0
    %251 = vmatpush1.bf16.msra.mxu0 0
    %252 = vmatprep.subr.bf16.mxu0 0
    %253 = vmatpush1.bf16.msra.mxu0 0
    %254 = vmatprep.subr.bf16.mxu0 0
    %255 = vmatpush1.bf16.msra.mxu0 0
    %256 = vmatprep.subr.bf16.mxu0 0
    %257 = vmatpush1.bf16.msra.mxu0 0
    %258 = vmatprep.subr.bf16.mxu0 0
    %259 = vmatpush1.bf16.msra.mxu0 0
    %260 = vmatprep.subr.bf16.mxu0 0
    %261 = vmatpush1.bf16.msra.mxu0 0
    %262 = vmatprep.subr.bf16.mxu0 0
    %263 = vmatpush1.bf16.msra.mxu0 0
    %264 = vmatprep.subr.bf16.mxu0 0
    %265 = vmatpush1.bf16.msra.mxu0 0
    %266 = vmatprep.subr.bf16.mxu0 0
    %267 = vmatpush1.bf16.msra.mxu0 0
    %268 = vmatprep.mubr.bf16.mxu0 0
    %269 = vmatmul.mubr.bf16.gmra.mrb[0].mxu0 %v111
    %v270 = vpop.f32.mrb[0].mxu0
    %v271 = vadd.f32 0.0, %v270
    %v272 = vpop.f32.mrb[0].mxu0
    %v273 = vadd.f32 0.0, %v272
    %v274 = vpop.f32.mrb[0].mxu0
    %v275 = vpop.f32.mrb[0].mxu0
    %276 = vdwg.mxu0
    %v277 = vld [vmem:[#allocation5] sm:$0xff]
    %v279 = vlaneseq
    %v280 = vshrl.u32 %v279, 7
    %v281 = vsub.s32 0, %v280
    %v282 = vrot.slane %v277, %v281
    %v283 = vlaneseq
    %v284 = vshrl.u32 %v283, 7
    %v285 = vsub.s32 1, %v284
    %v286 = vrot.slane %v277, %v285
    %v287 = vlaneseq
    %v288 = vshrl.u32 %v287, 7
    %v289 = vsub.s32 2, %v288
    %v290 = vrot.slane %v277, %v289
    %v291 = vlaneseq
    %v292 = vshrl.u32 %v291, 7
    %v293 = vsub.s32 3, %v292
    %v294 = vrot.slane %v277, %v293
    %v295 = vlaneseq
    %v296 = vshrl.u32 %v295, 7
    %v297 = vsub.s32 4, %v296
    %v298 = vrot.slane %v277, %v297
    %v299 = vlaneseq
    %v300 = vshrl.u32 %v299, 7
    %v301 = vsub.s32 5, %v300
    %v302 = vrot.slane %v277, %v301
    %v303 = vlaneseq
    %v304 = vshrl.u32 %v303, 7
    %v305 = vsub.s32 6, %v304
    %v306 = vrot.slane %v277, %v305
    %v307 = vlaneseq
    %v308 = vshrl.u32 %v307, 7
    %v309 = vsub.s32 7, %v308
    %v310 = vrot.slane %v277, %v309
    %v319 = vmul.f32 %v148, %v282
    %v320 = vmul.f32 %v150, %v286
    %v321 = vmul.f32 %v189, %v290
    %v322 = vmul.f32 %v191, %v294
    %v323 = vmul.f32 %v230, %v298
    %v324 = vmul.f32 %v232, %v302
    %v325 = vmul.f32 %v271, %v306
    %v326 = vmul.f32 %v273, %v310
    %vm327 = vcmp.lt.s32.totalorder %v42, 0
    %v328 = vsub.s32 0, %v42
    %v329 = vsel %vm327, %v328, %v42
    %v330 = vshrl.u32 %v329, 1
    %v331 = vand.u32 %v329, 1
    %v332 = vsub.s32 0, %v331
    %v333 = vsel %vm327, %v332, %v331
    %vm334 = vcmp.lt.s32.totalorder %v43, 0
    %v335 = vsub.s32 0, %v43
    %v336 = vsel %vm334, %v335, %v43
    %v337 = vshrl.u32 %v336, 1
    %v338 = vand.u32 %v336, 1
    %v339 = vsub.s32 0, %v338
    %v340 = vsel %vm334, %v339, %v338
    %vm341 = vcmp.lt.s32.totalorder %v44, 0
    %v342 = vsub.s32 0, %v44
    %v343 = vsel %vm341, %v342, %v44
    %v344 = vshrl.u32 %v343, 1
    %v345 = vand.u32 %v343, 1
    %v346 = vsub.s32 0, %v345
    %v347 = vsel %vm341, %v346, %v345
    %vm348 = vcmp.lt.s32.totalorder %v45, 0
    %v349 = vsub.s32 0, %v45
    %v350 = vsel %vm348, %v349, %v45
    %v351 = vshrl.u32 %v350, 1
    %v352 = vand.u32 %v350, 1
    %v353 = vsub.s32 0, %v352
    %v354 = vsel %vm348, %v353, %v352
    %vm355 = vcmp.lt.s32.totalorder %v46, 0
    %v356 = vsub.s32 0, %v46
    %v357 = vsel %vm355, %v356, %v46
    %v358 = vshrl.u32 %v357, 1
    %v359 = vand.u32 %v357, 1
    %v360 = vsub.s32 0, %v359
    %v361 = vsel %vm355, %v360, %v359
    %vm362 = vcmp.lt.s32.totalorder %v47, 0
    %v363 = vsub.s32 0, %v47
    %v364 = vsel %vm362, %v363, %v47
    %v365 = vshrl.u32 %v364, 1
    %v366 = vand.u32 %v364, 1
    %v367 = vsub.s32 0, %v366
    %v368 = vsel %vm362, %v367, %v366
    %vm369 = vcmp.lt.s32.totalorder %v48, 0
    %v370 = vsub.s32 0, %v48
    %v371 = vsel %vm369, %v370, %v48
    %v372 = vshrl.u32 %v371, 1
    %v373 = vand.u32 %v371, 1
    %v374 = vsub.s32 0, %v373
    %v375 = vsel %vm369, %v374, %v373
    %vm376 = vcmp.lt.s32.totalorder %v49, 0
    %v377 = vsub.s32 0, %v49
    %v378 = vsel %vm376, %v377, %v49
    %v379 = vshrl.u32 %v378, 1
    %v380 = vand.u32 %v378, 1
    %v381 = vsub.s32 0, %v380
    %v382 = vsel %vm376, %v381, %v380
    %vm383 = vcmp.ne.s32.totalorder %v333, 0
    %vm384 = vcmp.ne.s32.totalorder %v340, 0
    %vm385 = vcmp.ne.s32.totalorder %v347, 0
    %vm386 = vcmp.ne.s32.totalorder %v354, 0
    %vm387 = vcmp.ne.s32.totalorder %v361, 0
    %vm388 = vcmp.ne.s32.totalorder %v368, 0
    %vm389 = vcmp.ne.s32.totalorder %v375, 0
    %vm390 = vcmp.ne.s32.totalorder %v382, 0
    %vm391 = vcmp.lt.s32.totalorder %v333, 0
    %vm392 = vcmp.lt.s32.totalorder %v340, 0
    %vm393 = vcmp.lt.s32.totalorder %v347, 0
    %vm394 = vcmp.lt.s32.totalorder %v354, 0
    %vm395 = vcmp.lt.s32.totalorder %v361, 0
    %vm396 = vcmp.lt.s32.totalorder %v368, 0
    %vm397 = vcmp.lt.s32.totalorder %v375, 0
    %vm398 = vcmp.lt.s32.totalorder %v382, 0
    %vm399 = vmand %vm391, %vm383
    %vm400 = vmand %vm392, %vm384
    %vm401 = vmand %vm393, %vm385
    %vm402 = vmand %vm394, %vm386
    %vm403 = vmand %vm395, %vm387
    %vm404 = vmand %vm396, %vm388
    %vm405 = vmand %vm397, %vm389
    %vm406 = vmand %vm398, %vm390
    %v407 = vadd.s32 %v333, 2
    %v408 = vadd.s32 %v340, 2
    %v409 = vadd.s32 %v347, 2
    %v410 = vadd.s32 %v354, 2
    %v411 = vadd.s32 %v361, 2
    %v412 = vadd.s32 %v368, 2
    %v413 = vadd.s32 %v375, 2
    %v414 = vadd.s32 %v382, 2
    %v415 = vsel %vm399, %v407, %v333
    %v416 = vsel %vm400, %v408, %v340
    %v417 = vsel %vm401, %v409, %v347
    %v418 = vsel %vm402, %v410, %v354
    %v419 = vsel %vm403, %v411, %v361
    %v420 = vsel %vm404, %v412, %v368
    %v421 = vsel %vm405, %v413, %v375
    %v422 = vsel %vm406, %v414, %v382
    %v423 = vcvt.s32.f32 %v415
    %v424 = vcvt.s32.f32 %v416
    %v425 = vcvt.s32.f32 %v417
    %v426 = vcvt.s32.f32 %v418
    %v427 = vcvt.s32.f32 %v419
    %v428 = vcvt.s32.f32 %v420
    %v429 = vcvt.s32.f32 %v421
    %v430 = vcvt.s32.f32 %v422
    %v431 = vmul.f32 %v423, 1.5707964
    %v432 = vmul.f32 %v424, 1.5707964
    %v433 = vmul.f32 %v425, 1.5707964
    %v434 = vmul.f32 %v426, 1.5707964
    %v435 = vmul.f32 %v427, 1.5707964
    %v436 = vmul.f32 %v428, 1.5707964
    %v437 = vmul.f32 %v429, 1.5707964
    %v438 = vmul.f32 %v430, 1.5707964
    %v439 = vadd.f32 %v319, %v431
    %v440 = vadd.f32 %v320, %v432
    %v441 = vadd.f32 %v321, %v433
    %v442 = vadd.f32 %v322, %v434
    %v443 = vadd.f32 %v323, %v435
    %v444 = vadd.f32 %v324, %v436
    %v445 = vadd.f32 %v325, %v437
    %v446 = vadd.f32 %v326, %v438
    %v447 = vand.u32 2147483647, %v439
    %vm448 = vcmp.le.f32.partialorder %v447, 0.7853982
    %vm449 = vcmp.lt.s32.totalorder %v439, 0
    %v450 = vand.u32 %v439, 2139095040
    %v451 = vshrl.u32 %v450, 23
    %v452 = vsub.s32 %v451, 127
    %v453 = vand.u32 2147483647, %v439
    %v454 = vand.u32 %v453, 8388607
    %v455 = vor.u32 %v454, 8388608
    %v456 = vsub.s32 0, %v455
    %v457 = vadd.s32 %v452, 1
    %vm458 = vcmp.gt.s32.totalorder %v457, 0
    %v459 = vsel %vm458, %v457, 0
    %v460 = vshrl.u32 %v459, 5
    %v461 = vand.u32 %v459, 31
    %v462 = vsub.s32 32, %v461
    %v463 = vshrl.u32 683565275, %v462
    %v464 = vshll.u32 683565275, %v461
    %v465 = vshrl.u32 2475754826, %v462
    %v466 = vor.u32 %v464, %v465
    %v467 = vshll.u32 2475754826, %v461
    %v468 = vshrl.u32 2131351028, %v462
    %v469 = vor.u32 %v467, %v468
    %v470 = vshll.u32 2131351028, %v461
    %v471 = vshrl.u32 2102212464, %v462
    %v472 = vor.u32 %v470, %v471
    %v473 = vshll.u32 2102212464, %v461
    %v474 = vshrl.u32 920167782, %v462
    %v475 = vor.u32 %v473, %v474
    %v476 = vshll.u32 920167782, %v461
    %v477 = vshrl.u32 1326507024, %v462
    %v478 = vor.u32 %v476, %v477
    %vm479 = vcmp.lt.s32.totalorder %v460, 1
    %vm480 = vcmp.lt.s32.totalorder %v460, 2
    %vm481 = vcmp.lt.s32.totalorder %v460, 3
    %vm482 = vcmp.lt.s32.totalorder %v460, 4
    %v483 = vsel %vm479, %v463, %v466
    %v484 = vsel %vm482, %v472, 2102212464
    %v485 = vsel %vm481, %v469, %v484
    %v486 = vsel %vm480, %v483, %v485
    %v487 = vsel %vm479, %v466, %v469
    %v488 = vsel %vm482, %v475, 920167782
    %v489 = vsel %vm481, %v472, %v488
    %v490 = vsel %vm480, %v487, %v489
    %v491 = vsel %vm479, %v469, %v472
    %v492 = vsel %vm482, %v478, 1326507024
    %v493 = vsel %vm481, %v475, %v492
    %v494 = vsel %vm480, %v491, %v493
    %v495 = vshll.u32 %v455, 8
    %v496 = vmul.u32.u64.compose %v495, %v494
    %v497 = vextract.low.u32 %v496
    %v498 = vextract.high.u32 %v496
    %v499 = vmul.u32.u64.compose %v495, %v490
    %v500 = vextract.low.u32 %v499
    %v501 = vextract.high.u32 %v499
    %v502 = vmul.u32 %v495, %v486
    %v503 = vadd.s32 %v498, %v500
    %vm504 = vc.u32 %v498, %v500
    %v505 = vadd.s32 %v501, 1
    %v506 = vsel %vm504, %v505, %v501
    %v507 = vadd.s32 %v502, %v506
    %v508 = vadd.s32 %v507, 536870912
    %v509 = vshrl.u32 %v508, 30
    %v510 = vshll.u32 %v509, 30
    %v511 = vsub.s32 %v507, %v510
    %vm512 = vcmp.lt.s32.totalorder %v511, 0
    %v513 = vsub.s32 0, %v511
    %v514 = vsel %vm512, %v513, %v511
    %v515 = vclz %v514
    %v516 = vsub.s32 %v515, 2
    %vm517 = vcmp.gt.s32.totalorder 0, %v516
    %v518 = vsel %vm517, 0, %v516
    %v519 = vsub.s32 32, %v518
    %v520 = vshll.u32 %v511, %v518
    %v521 = vshrl.u32 %v503, %v519
    %v522 = vor.u32 %v520, %v521
    %v523 = vsub.s32 4294967266, %v518
    %v524 = vadd.s32 %v523, 127
    %v525 = vshll.u32 %v524, 23
    %v526 = vor.u32 4788187, %v525
    %v527 = vand.u32 2147483647, %v526
    %v529 = vcvt.s32.f32 %v522
    %v530 = vmul.f32 %v529, %v527
    %v531 = vxor.u32 %v530, 2147483648
    %v532 = vsel %vm449, %v531, %v530
    %v533 = vsub.s32 4, %v509
    %v534 = vsel %vm449, %v533, %v509
    %v535 = vsel %vm448, %v439, %v532
    %v536 = vsel %vm448, 0, %v534
    %v537 = vcosq.f32.pop %v535
    %v538 = vsinq.f32.pop %v535
    %vm539 = vweird.f32 %v439
    %v540 = vadd.s32 %v536, 3
    %v541 = vand.u32 %v540, 3
    %vm542 = vcmp.lt.s32.totalorder %v541, 2
    %vm543 = vcmp.eq.s32.totalorder %v541, 0
    %v544 = vxor.u32 %v538, 2147483648
    %v545 = vsel %vm543, %v537, %v544
    %vm546 = vcmp.eq.s32.totalorder %v541, 2
    %v547 = vxor.u32 %v537, 2147483648
    %v548 = vsel %vm546, %v547, %v538
    %v549 = vsel %vm542, %v545, %v548
    %v550 = vsel %vm539, nan, %v549
    %v551 = vand.u32 2147483647, %v440
    %vm552 = vcmp.le.f32.partialorder %v551, 0.7853982
    %vm553 = vcmp.lt.s32.totalorder %v440, 0
    %v554 = vand.u32 %v440, 2139095040
    %v555 = vshrl.u32 %v554, 23
    %v556 = vsub.s32 %v555, 127
    %v557 = vand.u32 2147483647, %v440
    %v558 = vand.u32 %v557, 8388607
    %v559 = vor.u32 %v558, 8388608
    %v560 = vsub.s32 0, %v559
    %v561 = vadd.s32 %v556, 1
    %vm562 = vcmp.gt.s32.totalorder %v561, 0
    %v563 = vsel %vm562, %v561, 0
    %v564 = vshrl.u32 %v563, 5
    %v565 = vand.u32 %v563, 31
    %v566 = vsub.s32 32, %v565
    %v567 = vshrl.u32 683565275, %v566
    %v568 = vshll.u32 683565275, %v565
    %v569 = vshrl.u32 2475754826, %v566
    %v570 = vor.u32 %v568, %v569
    %v571 = vshll.u32 2475754826, %v565
    %v572 = vshrl.u32 2131351028, %v566
    %v573 = vor.u32 %v571, %v572
    %v574 = vshll.u32 2131351028, %v565
    %v575 = vshrl.u32 2102212464, %v566
    %v576 = vor.u32 %v574, %v575
    %v577 = vshll.u32 2102212464, %v565
    %v578 = vshrl.u32 920167782, %v566
    %v579 = vor.u32 %v577, %v578
    %v580 = vshll.u32 920167782, %v565
    %v581 = vshrl.u32 1326507024, %v566
    %v582 = vor.u32 %v580, %v581
    %vm583 = vcmp.lt.s32.totalorder %v564, 1
    %vm584 = vcmp.lt.s32.totalorder %v564, 2
    %vm585 = vcmp.lt.s32.totalorder %v564, 3
    %vm586 = vcmp.lt.s32.totalorder %v564, 4
    %v587 = vsel %vm583, %v567, %v570
    %v588 = vsel %vm586, %v576, 2102212464
    %v589 = vsel %vm585, %v573, %v588
    %v590 = vsel %vm584, %v587, %v589
    %v591 = vsel %vm583, %v570, %v573
    %v592 = vsel %vm586, %v579, 920167782
    %v593 = vsel %vm585, %v576, %v592
    %v594 = vsel %vm584, %v591, %v593
    %v595 = vsel %vm583, %v573, %v576
    %v596 = vsel %vm586, %v582, 1326507024
    %v597 = vsel %vm585, %v579, %v596
    %v598 = vsel %vm584, %v595, %v597
    %v599 = vshll.u32 %v559, 8
    %v600 = vmul.u32.u64.compose %v599, %v598
    %v601 = vextract.low.u32 %v600
    %v602 = vextract.high.u32 %v600
    %v603 = vmul.u32.u64.compose %v599, %v594
    %v604 = vextract.low.u32 %v603
    %v605 = vextract.high.u32 %v603
    %v606 = vmul.u32 %v599, %v590
    %v607 = vadd.s32 %v602, %v604
    %vm608 = vc.u32 %v602, %v604
    %v609 = vadd.s32 %v605, 1
    %v610 = vsel %vm608, %v609, %v605
    %v611 = vadd.s32 %v606, %v610
    %v612 = vadd.s32 %v611, 536870912
    %v613 = vshrl.u32 %v612, 30
    %v614 = vshll.u32 %v613, 30
    %v615 = vsub.s32 %v611, %v614
    %vm616 = vcmp.lt.s32.totalorder %v615, 0
    %v617 = vsub.s32 0, %v615
    %v618 = vsel %vm616, %v617, %v615
    %v619 = vclz %v618
    %v620 = vsub.s32 %v619, 2
    %vm621 = vcmp.gt.s32.totalorder 0, %v620
    %v622 = vsel %vm621, 0, %v620
    %v623 = vsub.s32 32, %v622
    %v624 = vshll.u32 %v615, %v622
    %v625 = vshrl.u32 %v607, %v623
    %v626 = vor.u32 %v624, %v625
    %v627 = vsub.s32 4294967266, %v622
    %v628 = vadd.s32 %v627, 127
    %v629 = vshll.u32 %v628, 23
    %v630 = vor.u32 4788187, %v629
    %v631 = vand.u32 2147483647, %v630
    %v633 = vcvt.s32.f32 %v626
    %v634 = vmul.f32 %v633, %v631
    %v635 = vxor.u32 %v634, 2147483648
    %v636 = vsel %vm553, %v635, %v634
    %v637 = vsub.s32 4, %v613
    %v638 = vsel %vm553, %v637, %v613
    %v639 = vsel %vm552, %v440, %v636
    %v640 = vsel %vm552, 0, %v638
    %v641 = vcosq.f32.pop %v639
    %v642 = vsinq.f32.pop %v639
    %vm643 = vweird.f32 %v440
    %v644 = vadd.s32 %v640, 3
    %v645 = vand.u32 %v644, 3
    %vm646 = vcmp.lt.s32.totalorder %v645, 2
    %vm647 = vcmp.eq.s32.totalorder %v645, 0
    %v648 = vxor.u32 %v642, 2147483648
    %v649 = vsel %vm647, %v641, %v648
    %vm650 = vcmp.eq.s32.totalorder %v645, 2
    %v651 = vxor.u32 %v641, 2147483648
    %v652 = vsel %vm650, %v651, %v642
    %v653 = vsel %vm646, %v649, %v652
    %v654 = vsel %vm643, nan, %v653
    %v655 = vand.u32 2147483647, %v441
    %vm656 = vcmp.le.f32.partialorder %v655, 0.7853982
    %vm657 = vcmp.lt.s32.totalorder %v441, 0
    %v658 = vand.u32 %v441, 2139095040
    %v659 = vshrl.u32 %v658, 23
    %v660 = vsub.s32 %v659, 127
    %v661 = vand.u32 2147483647, %v441
    %v662 = vand.u32 %v661, 8388607
    %v663 = vor.u32 %v662, 8388608
    %v664 = vsub.s32 0, %v663
    %v665 = vadd.s32 %v660, 1
    %vm666 = vcmp.gt.s32.totalorder %v665, 0
    %v667 = vsel %vm666, %v665, 0
    %v668 = vshrl.u32 %v667, 5
    %v669 = vand.u32 %v667, 31
    %v670 = vsub.s32 32, %v669
    %v671 = vshrl.u32 683565275, %v670
    %v672 = vshll.u32 683565275, %v669
    %v673 = vshrl.u32 2475754826, %v670
    %v674 = vor.u32 %v672, %v673
    %v675 = vshll.u32 2475754826, %v669
    %v676 = vshrl.u32 2131351028, %v670
    %v677 = vor.u32 %v675, %v676
    %v678 = vshll.u32 2131351028, %v669
    %v679 = vshrl.u32 2102212464, %v670
    %v680 = vor.u32 %v678, %v679
    %v681 = vshll.u32 2102212464, %v669
    %v682 = vshrl.u32 920167782, %v670
    %v683 = vor.u32 %v681, %v682
    %v684 = vshll.u32 920167782, %v669
    %v685 = vshrl.u32 1326507024, %v670
    %v686 = vor.u32 %v684, %v685
    %vm687 = vcmp.lt.s32.totalorder %v668, 1
    %vm688 = vcmp.lt.s32.totalorder %v668, 2
    %vm689 = vcmp.lt.s32.totalorder %v668, 3
    %vm690 = vcmp.lt.s32.totalorder %v668, 4
    %v691 = vsel %vm687, %v671, %v674
    %v692 = vsel %vm690, %v680, 2102212464
    %v693 = vsel %vm689, %v677, %v692
    %v694 = vsel %vm688, %v691, %v693
    %v695 = vsel %vm687, %v674, %v677
    %v696 = vsel %vm690, %v683, 920167782
    %v697 = vsel %vm689, %v680, %v696
    %v698 = vsel %vm688, %v695, %v697
    %v699 = vsel %vm687, %v677, %v680
    %v700 = vsel %vm690, %v686, 1326507024
    %v701 = vsel %vm689, %v683, %v700
    %v702 = vsel %vm688, %v699, %v701
    %v703 = vshll.u32 %v663, 8
    %v704 = vmul.u32.u64.compose %v703, %v702
    %v705 = vextract.low.u32 %v704
    %v706 = vextract.high.u32 %v704
    %v707 = vmul.u32.u64.compose %v703, %v698
    %v708 = vextract.low.u32 %v707
    %v709 = vextract.high.u32 %v707
    %v710 = vmul.u32 %v703, %v694
    %v711 = vadd.s32 %v706, %v708
    %vm712 = vc.u32 %v706, %v708
    %v713 = vadd.s32 %v709, 1
    %v714 = vsel %vm712, %v713, %v709
    %v715 = vadd.s32 %v710, %v714
    %v716 = vadd.s32 %v715, 536870912
    %v717 = vshrl.u32 %v716, 30
    %v718 = vshll.u32 %v717, 30
    %v719 = vsub.s32 %v715, %v718
    %vm720 = vcmp.lt.s32.totalorder %v719, 0
    %v721 = vsub.s32 0, %v719
    %v722 = vsel %vm720, %v721, %v719
    %v723 = vclz %v722
    %v724 = vsub.s32 %v723, 2
    %vm725 = vcmp.gt.s32.totalorder 0, %v724
    %v726 = vsel %vm725, 0, %v724
    %v727 = vsub.s32 32, %v726
    %v728 = vshll.u32 %v719, %v726
    %v729 = vshrl.u32 %v711, %v727
    %v730 = vor.u32 %v728, %v729
    %v731 = vsub.s32 4294967266, %v726
    %v732 = vadd.s32 %v731, 127
    %v733 = vshll.u32 %v732, 23
    %v734 = vor.u32 4788187, %v733
    %v735 = vand.u32 2147483647, %v734
    %v737 = vcvt.s32.f32 %v730
    %v738 = vmul.f32 %v737, %v735
    %v739 = vxor.u32 %v738, 2147483648
    %v740 = vsel %vm657, %v739, %v738
    %v741 = vsub.s32 4, %v717
    %v742 = vsel %vm657, %v741, %v717
    %v743 = vsel %vm656, %v441, %v740
    %v744 = vsel %vm656, 0, %v742
    %v745 = vcosq.f32.pop %v743
    %v746 = vsinq.f32.pop %v743
    %vm747 = vweird.f32 %v441
    %v748 = vadd.s32 %v744, 3
    %v749 = vand.u32 %v748, 3
    %vm750 = vcmp.lt.s32.totalorder %v749, 2
    %vm751 = vcmp.eq.s32.totalorder %v749, 0
    %v752 = vxor.u32 %v746, 2147483648
    %v753 = vsel %vm751, %v745, %v752
    %vm754 = vcmp.eq.s32.totalorder %v749, 2
    %v755 = vxor.u32 %v745, 2147483648
    %v756 = vsel %vm754, %v755, %v746
    %v757 = vsel %vm750, %v753, %v756
    %v758 = vsel %vm747, nan, %v757
    %v759 = vand.u32 2147483647, %v442
    %vm760 = vcmp.le.f32.partialorder %v759, 0.7853982
    %vm761 = vcmp.lt.s32.totalorder %v442, 0
    %v762 = vand.u32 %v442, 2139095040
    %v763 = vshrl.u32 %v762, 23
    %v764 = vsub.s32 %v763, 127
    %v765 = vand.u32 2147483647, %v442
    %v766 = vand.u32 %v765, 8388607
    %v767 = vor.u32 %v766, 8388608
    %v768 = vsub.s32 0, %v767
    %v769 = vadd.s32 %v764, 1
    %vm770 = vcmp.gt.s32.totalorder %v769, 0
    %v771 = vsel %vm770, %v769, 0
    %v772 = vshrl.u32 %v771, 5
    %v773 = vand.u32 %v771, 31
    %v774 = vsub.s32 32, %v773
    %v775 = vshrl.u32 683565275, %v774
    %v776 = vshll.u32 683565275, %v773
    %v777 = vshrl.u32 2475754826, %v774
    %v778 = vor.u32 %v776, %v777
    %v779 = vshll.u32 2475754826, %v773
    %v780 = vshrl.u32 2131351028, %v774
    %v781 = vor.u32 %v779, %v780
    %v782 = vshll.u32 2131351028, %v773
    %v783 = vshrl.u32 2102212464, %v774
    %v784 = vor.u32 %v782, %v783
    %v785 = vshll.u32 2102212464, %v773
    %v786 = vshrl.u32 920167782, %v774
    %v787 = vor.u32 %v785, %v786
    %v788 = vshll.u32 920167782, %v773
    %v789 = vshrl.u32 1326507024, %v774
    %v790 = vor.u32 %v788, %v789
    %vm791 = vcmp.lt.s32.totalorder %v772, 1
    %vm792 = vcmp.lt.s32.totalorder %v772, 2
    %vm793 = vcmp.lt.s32.totalorder %v772, 3
    %vm794 = vcmp.lt.s32.totalorder %v772, 4
    %v795 = vsel %vm791, %v775, %v778
    %v796 = vsel %vm794, %v784, 2102212464
    %v797 = vsel %vm793, %v781, %v796
    %v798 = vsel %vm792, %v795, %v797
    %v799 = vsel %vm791, %v778, %v781
    %v800 = vsel %vm794, %v787, 920167782
    %v801 = vsel %vm793, %v784, %v800
    %v802 = vsel %vm792, %v799, %v801
    %v803 = vsel %vm791, %v781, %v784
    %v804 = vsel %vm794, %v790, 1326507024
    %v805 = vsel %vm793, %v787, %v804
    %v806 = vsel %vm792, %v803, %v805
    %v807 = vshll.u32 %v767, 8
    %v808 = vmul.u32.u64.compose %v807, %v806
    %v809 = vextract.low.u32 %v808
    %v810 = vextract.high.u32 %v808
    %v811 = vmul.u32.u64.compose %v807, %v802
    %v812 = vextract.low.u32 %v811
    %v813 = vextract.high.u32 %v811
    %v814 = vmul.u32 %v807, %v798
    %v815 = vadd.s32 %v810, %v812
    %vm816 = vc.u32 %v810, %v812
    %v817 = vadd.s32 %v813, 1
    %v818 = vsel %vm816, %v817, %v813
    %v819 = vadd.s32 %v814, %v818
    %v820 = vadd.s32 %v819, 536870912
    %v821 = vshrl.u32 %v820, 30
    %v822 = vshll.u32 %v821, 30
    %v823 = vsub.s32 %v819, %v822
    %vm824 = vcmp.lt.s32.totalorder %v823, 0
    %v825 = vsub.s32 0, %v823
    %v826 = vsel %vm824, %v825, %v823
    %v827 = vclz %v826
    %v828 = vsub.s32 %v827, 2
    %vm829 = vcmp.gt.s32.totalorder 0, %v828
    %v830 = vsel %vm829, 0, %v828
    %v831 = vsub.s32 32, %v830
    %v832 = vshll.u32 %v823, %v830
    %v833 = vshrl.u32 %v815, %v831
    %v834 = vor.u32 %v832, %v833
    %v835 = vsub.s32 4294967266, %v830
    %v836 = vadd.s32 %v835, 127
    %v837 = vshll.u32 %v836, 23
    %v838 = vor.u32 4788187, %v837
    %v839 = vand.u32 2147483647, %v838
    %v841 = vcvt.s32.f32 %v834
    %v842 = vmul.f32 %v841, %v839
    %v843 = vxor.u32 %v842, 2147483648
    %v844 = vsel %vm761, %v843, %v842
    %v845 = vsub.s32 4, %v821
    %v846 = vsel %vm761, %v845, %v821
    %v847 = vsel %vm760, %v442, %v844
    %v848 = vsel %vm760, 0, %v846
    %v849 = vcosq.f32.pop %v847
    %v850 = vsinq.f32.pop %v847
    %vm851 = vweird.f32 %v442
    %v852 = vadd.s32 %v848, 3
    %v853 = vand.u32 %v852, 3
    %vm854 = vcmp.lt.s32.totalorder %v853, 2
    %vm855 = vcmp.eq.s32.totalorder %v853, 0
    %v856 = vxor.u32 %v850, 2147483648
    %v857 = vsel %vm855, %v849, %v856
    %vm858 = vcmp.eq.s32.totalorder %v853, 2
    %v859 = vxor.u32 %v849, 2147483648
    %v860 = vsel %vm858, %v859, %v850
    %v861 = vsel %vm854, %v857, %v860
    %v862 = vsel %vm851, nan, %v861
    %v863 = vand.u32 2147483647, %v443
    %vm864 = vcmp.le.f32.partialorder %v863, 0.7853982
    %vm865 = vcmp.lt.s32.totalorder %v443, 0
    %v866 = vand.u32 %v443, 2139095040
    %v867 = vshrl.u32 %v866, 23
    %v868 = vsub.s32 %v867, 127
    %v869 = vand.u32 2147483647, %v443
    %v870 = vand.u32 %v869, 8388607
    %v871 = vor.u32 %v870, 8388608
    %v872 = vsub.s32 0, %v871
    %v873 = vadd.s32 %v868, 1
    %vm874 = vcmp.gt.s32.totalorder %v873, 0
    %v875 = vsel %vm874, %v873, 0
    %v876 = vshrl.u32 %v875, 5
    %v877 = vand.u32 %v875, 31
    %v878 = vsub.s32 32, %v877
    %v879 = vshrl.u32 683565275, %v878
    %v880 = vshll.u32 683565275, %v877
    %v881 = vshrl.u32 2475754826, %v878
    %v882 = vor.u32 %v880, %v881
    %v883 = vshll.u32 2475754826, %v877
    %v884 = vshrl.u32 2131351028, %v878
    %v885 = vor.u32 %v883, %v884
    %v886 = vshll.u32 2131351028, %v877
    %v887 = vshrl.u32 2102212464, %v878
    %v888 = vor.u32 %v886, %v887
    %v889 = vshll.u32 2102212464, %v877
    %v890 = vshrl.u32 920167782, %v878
    %v891 = vor.u32 %v889, %v890
    %v892 = vshll.u32 920167782, %v877
    %v893 = vshrl.u32 1326507024, %v878
    %v894 = vor.u32 %v892, %v893
    %vm895 = vcmp.lt.s32.totalorder %v876, 1
    %vm896 = vcmp.lt.s32.totalorder %v876, 2
    %vm897 = vcmp.lt.s32.totalorder %v876, 3
    %vm898 = vcmp.lt.s32.totalorder %v876, 4
    %v899 = vsel %vm895, %v879, %v882
    %v900 = vsel %vm898, %v888, 2102212464
    %v901 = vsel %vm897, %v885, %v900
    %v902 = vsel %vm896, %v899, %v901
    %v903 = vsel %vm895, %v882, %v885
    %v904 = vsel %vm898, %v891, 920167782
    %v905 = vsel %vm897, %v888, %v904
    %v906 = vsel %vm896, %v903, %v905
    %v907 = vsel %vm895, %v885, %v888
    %v908 = vsel %vm898, %v894, 1326507024
    %v909 = vsel %vm897, %v891, %v908
    %v910 = vsel %vm896, %v907, %v909
    %v911 = vshll.u32 %v871, 8
    %v912 = vmul.u32.u64.compose %v911, %v910
    %v913 = vextract.low.u32 %v912
    %v914 = vextract.high.u32 %v912
    %v915 = vmul.u32.u64.compose %v911, %v906
    %v916 = vextract.low.u32 %v915
    %v917 = vextract.high.u32 %v915
    %v918 = vmul.u32 %v911, %v902
    %v919 = vadd.s32 %v914, %v916
    %vm920 = vc.u32 %v914, %v916
    %v921 = vadd.s32 %v917, 1
    %v922 = vsel %vm920, %v921, %v917
    %v923 = vadd.s32 %v918, %v922
    %v924 = vadd.s32 %v923, 536870912
    %v925 = vshrl.u32 %v924, 30
    %v926 = vshll.u32 %v925, 30
    %v927 = vsub.s32 %v923, %v926
    %vm928 = vcmp.lt.s32.totalorder %v927, 0
    %v929 = vsub.s32 0, %v927
    %v930 = vsel %vm928, %v929, %v927
    %v931 = vclz %v930
    %v932 = vsub.s32 %v931, 2
    %vm933 = vcmp.gt.s32.totalorder 0, %v932
    %v934 = vsel %vm933, 0, %v932
    %v935 = vsub.s32 32, %v934
    %v936 = vshll.u32 %v927, %v934
    %v937 = vshrl.u32 %v919, %v935
    %v938 = vor.u32 %v936, %v937
    %v939 = vsub.s32 4294967266, %v934
    %v940 = vadd.s32 %v939, 127
    %v941 = vshll.u32 %v940, 23
    %v942 = vor.u32 4788187, %v941
    %v943 = vand.u32 2147483647, %v942
    %v945 = vcvt.s32.f32 %v938
    %v946 = vmul.f32 %v945, %v943
    %v947 = vxor.u32 %v946, 2147483648
    %v948 = vsel %vm865, %v947, %v946
    %v949 = vsub.s32 4, %v925
    %v950 = vsel %vm865, %v949, %v925
    %v951 = vsel %vm864, %v443, %v948
    %v952 = vsel %vm864, 0, %v950
    %v953 = vcosq.f32.pop %v951
    %v954 = vsinq.f32.pop %v951
    %vm955 = vweird.f32 %v443
    %v956 = vadd.s32 %v952, 3
    %v957 = vand.u32 %v956, 3
    %vm958 = vcmp.lt.s32.totalorder %v957, 2
    %vm959 = vcmp.eq.s32.totalorder %v957, 0
    %v960 = vxor.u32 %v954, 2147483648
    %v961 = vsel %vm959, %v953, %v960
    %vm962 = vcmp.eq.s32.totalorder %v957, 2
    %v963 = vxor.u32 %v953, 2147483648
    %v964 = vsel %vm962, %v963, %v954
    %v965 = vsel %vm958, %v961, %v964
    %v966 = vsel %vm955, nan, %v965
    %v967 = vand.u32 2147483647, %v444
    %vm968 = vcmp.le.f32.partialorder %v967, 0.7853982
    %vm969 = vcmp.lt.s32.totalorder %v444, 0
    %v970 = vand.u32 %v444, 2139095040
    %v971 = vshrl.u32 %v970, 23
    %v972 = vsub.s32 %v971, 127
    %v973 = vand.u32 2147483647, %v444
    %v974 = vand.u32 %v973, 8388607
    %v975 = vor.u32 %v974, 8388608
    %v976 = vsub.s32 0, %v975
    %v977 = vadd.s32 %v972, 1
    %vm978 = vcmp.gt.s32.totalorder %v977, 0
    %v979 = vsel %vm978, %v977, 0
    %v980 = vshrl.u32 %v979, 5
    %v981 = vand.u32 %v979, 31
    %v982 = vsub.s32 32, %v981
    %v983 = vshrl.u32 683565275, %v982
    %v984 = vshll.u32 683565275, %v981
    %v985 = vshrl.u32 2475754826, %v982
    %v986 = vor.u32 %v984, %v985
    %v987 = vshll.u32 2475754826, %v981
    %v988 = vshrl.u32 2131351028, %v982
    %v989 = vor.u32 %v987, %v988
    %v990 = vshll.u32 2131351028, %v981
    %v991 = vshrl.u32 2102212464, %v982
    %v992 = vor.u32 %v990, %v991
    %v993 = vshll.u32 2102212464, %v981
    %v994 = vshrl.u32 920167782, %v982
    %v995 = vor.u32 %v993, %v994
    %v996 = vshll.u32 920167782, %v981
    %v997 = vshrl.u32 1326507024, %v982
    %v998 = vor.u32 %v996, %v997
    %vm999 = vcmp.lt.s32.totalorder %v980, 1
    %vm1000 = vcmp.lt.s32.totalorder %v980, 2
    %vm1001 = vcmp.lt.s32.totalorder %v980, 3
    %vm1002 = vcmp.lt.s32.totalorder %v980, 4
    %v1003 = vsel %vm999, %v983, %v986
    %v1004 = vsel %vm1002, %v992, 2102212464
    %v1005 = vsel %vm1001, %v989, %v1004
    %v1006 = vsel %vm1000, %v1003, %v1005
    %v1007 = vsel %vm999, %v986, %v989
    %v1008 = vsel %vm1002, %v995, 920167782
    %v1009 = vsel %vm1001, %v992, %v1008
    %v1010 = vsel %vm1000, %v1007, %v1009
    %v1011 = vsel %vm999, %v989, %v992
    %v1012 = vsel %vm1002, %v998, 1326507024
    %v1013 = vsel %vm1001, %v995, %v1012
    %v1014 = vsel %vm1000, %v1011, %v1013
    %v1015 = vshll.u32 %v975, 8
    %v1016 = vmul.u32.u64.compose %v1015, %v1014
    %v1017 = vextract.low.u32 %v1016
    %v1018 = vextract.high.u32 %v1016
    %v1019 = vmul.u32.u64.compose %v1015, %v1010
    %v1020 = vextract.low.u32 %v1019
    %v1021 = vextract.high.u32 %v1019
    %v1022 = vmul.u32 %v1015, %v1006
    %v1023 = vadd.s32 %v1018, %v1020
    %vm1024 = vc.u32 %v1018, %v1020
    %v1025 = vadd.s32 %v1021, 1
    %v1026 = vsel %vm1024, %v1025, %v1021
    %v1027 = vadd.s32 %v1022, %v1026
    %v1028 = vadd.s32 %v1027, 536870912
    %v1029 = vshrl.u32 %v1028, 30
    %v1030 = vshll.u32 %v1029, 30
    %v1031 = vsub.s32 %v1027, %v1030
    %vm1032 = vcmp.lt.s32.totalorder %v1031, 0
    %v1033 = vsub.s32 0, %v1031
    %v1034 = vsel %vm1032, %v1033, %v1031
    %v1035 = vclz %v1034
    %v1036 = vsub.s32 %v1035, 2
    %vm1037 = vcmp.gt.s32.totalorder 0, %v1036
    %v1038 = vsel %vm1037, 0, %v1036
    %v1039 = vsub.s32 32, %v1038
    %v1040 = vshll.u32 %v1031, %v1038
    %v1041 = vshrl.u32 %v1023, %v1039
    %v1042 = vor.u32 %v1040, %v1041
    %v1043 = vsub.s32 4294967266, %v1038
    %v1044 = vadd.s32 %v1043, 127
    %v1045 = vshll.u32 %v1044, 23
    %v1046 = vor.u32 4788187, %v1045
    %v1047 = vand.u32 2147483647, %v1046
    %v1049 = vcvt.s32.f32 %v1042
    %v1050 = vmul.f32 %v1049, %v1047
    %v1051 = vxor.u32 %v1050, 2147483648
    %v1052 = vsel %vm969, %v1051, %v1050
    %v1053 = vsub.s32 4, %v1029
    %v1054 = vsel %vm969, %v1053, %v1029
    %v1055 = vsel %vm968, %v444, %v1052
    %v1056 = vsel %vm968, 0, %v1054
    %v1057 = vcosq.f32.pop %v1055
    %v1058 = vsinq.f32.pop %v1055
    %vm1059 = vweird.f32 %v444
    %v1060 = vadd.s32 %v1056, 3
    %v1061 = vand.u32 %v1060, 3
    %vm1062 = vcmp.lt.s32.totalorder %v1061, 2
    %vm1063 = vcmp.eq.s32.totalorder %v1061, 0
    %v1064 = vxor.u32 %v1058, 2147483648
    %v1065 = vsel %vm1063, %v1057, %v1064
    %vm1066 = vcmp.eq.s32.totalorder %v1061, 2
    %v1067 = vxor.u32 %v1057, 2147483648
    %v1068 = vsel %vm1066, %v1067, %v1058
    %v1069 = vsel %vm1062, %v1065, %v1068
    %v1070 = vsel %vm1059, nan, %v1069
    %v1071 = vand.u32 2147483647, %v445
    %vm1072 = vcmp.le.f32.partialorder %v1071, 0.7853982
    %vm1073 = vcmp.lt.s32.totalorder %v445, 0
    %v1074 = vand.u32 %v445, 2139095040
    %v1075 = vshrl.u32 %v1074, 23
    %v1076 = vsub.s32 %v1075, 127
    %v1077 = vand.u32 2147483647, %v445
    %v1078 = vand.u32 %v1077, 8388607
    %v1079 = vor.u32 %v1078, 8388608
    %v1080 = vsub.s32 0, %v1079
    %v1081 = vadd.s32 %v1076, 1
    %vm1082 = vcmp.gt.s32.totalorder %v1081, 0
    %v1083 = vsel %vm1082, %v1081, 0
    %v1084 = vshrl.u32 %v1083, 5
    %v1085 = vand.u32 %v1083, 31
    %v1086 = vsub.s32 32, %v1085
    %v1087 = vshrl.u32 683565275, %v1086
    %v1088 = vshll.u32 683565275, %v1085
    %v1089 = vshrl.u32 2475754826, %v1086
    %v1090 = vor.u32 %v1088, %v1089
    %v1091 = vshll.u32 2475754826, %v1085
    %v1092 = vshrl.u32 2131351028, %v1086
    %v1093 = vor.u32 %v1091, %v1092
    %v1094 = vshll.u32 2131351028, %v1085
    %v1095 = vshrl.u32 2102212464, %v1086
    %v1096 = vor.u32 %v1094, %v1095
    %v1097 = vshll.u32 2102212464, %v1085
    %v1098 = vshrl.u32 920167782, %v1086
    %v1099 = vor.u32 %v1097, %v1098
    %v1100 = vshll.u32 920167782, %v1085
    %v1101 = vshrl.u32 1326507024, %v1086
    %v1102 = vor.u32 %v1100, %v1101
    %vm1103 = vcmp.lt.s32.totalorder %v1084, 1
    %vm1104 = vcmp.lt.s32.totalorder %v1084, 2
    %vm1105 = vcmp.lt.s32.totalorder %v1084, 3
    %vm1106 = vcmp.lt.s32.totalorder %v1084, 4
    %v1107 = vsel %vm1103, %v1087, %v1090
    %v1108 = vsel %vm1106, %v1096, 2102212464
    %v1109 = vsel %vm1105, %v1093, %v1108
    %v1110 = vsel %vm1104, %v1107, %v1109
    %v1111 = vsel %vm1103, %v1090, %v1093
    %v1112 = vsel %vm1106, %v1099, 920167782
    %v1113 = vsel %vm1105, %v1096, %v1112
    %v1114 = vsel %vm1104, %v1111, %v1113
    %v1115 = vsel %vm1103, %v1093, %v1096
    %v1116 = vsel %vm1106, %v1102, 1326507024
    %v1117 = vsel %vm1105, %v1099, %v1116
    %v1118 = vsel %vm1104, %v1115, %v1117
    %v1119 = vshll.u32 %v1079, 8
    %v1120 = vmul.u32.u64.compose %v1119, %v1118
    %v1121 = vextract.low.u32 %v1120
    %v1122 = vextract.high.u32 %v1120
    %v1123 = vmul.u32.u64.compose %v1119, %v1114
    %v1124 = vextract.low.u32 %v1123
    %v1125 = vextract.high.u32 %v1123
    %v1126 = vmul.u32 %v1119, %v1110
    %v1127 = vadd.s32 %v1122, %v1124
    %vm1128 = vc.u32 %v1122, %v1124
    %v1129 = vadd.s32 %v1125, 1
    %v1130 = vsel %vm1128, %v1129, %v1125
    %v1131 = vadd.s32 %v1126, %v1130
    %v1132 = vadd.s32 %v1131, 536870912
    %v1133 = vshrl.u32 %v1132, 30
    %v1134 = vshll.u32 %v1133, 30
    %v1135 = vsub.s32 %v1131, %v1134
    %vm1136 = vcmp.lt.s32.totalorder %v1135, 0
    %v1137 = vsub.s32 0, %v1135
    %v1138 = vsel %vm1136, %v1137, %v1135
    %v1139 = vclz %v1138
    %v1140 = vsub.s32 %v1139, 2
    %vm1141 = vcmp.gt.s32.totalorder 0, %v1140
    %v1142 = vsel %vm1141, 0, %v1140
    %v1143 = vsub.s32 32, %v1142
    %v1144 = vshll.u32 %v1135, %v1142
    %v1145 = vshrl.u32 %v1127, %v1143
    %v1146 = vor.u32 %v1144, %v1145
    %v1147 = vsub.s32 4294967266, %v1142
    %v1148 = vadd.s32 %v1147, 127
    %v1149 = vshll.u32 %v1148, 23
    %v1150 = vor.u32 4788187, %v1149
    %v1151 = vand.u32 2147483647, %v1150
    %v1153 = vcvt.s32.f32 %v1146
    %v1154 = vmul.f32 %v1153, %v1151
    %v1155 = vxor.u32 %v1154, 2147483648
    %v1156 = vsel %vm1073, %v1155, %v1154
    %v1157 = vsub.s32 4, %v1133
    %v1158 = vsel %vm1073, %v1157, %v1133
    %v1159 = vsel %vm1072, %v445, %v1156
    %v1160 = vsel %vm1072, 0, %v1158
    %v1161 = vcosq.f32.pop %v1159
    %v1162 = vsinq.f32.pop %v1159
    %vm1163 = vweird.f32 %v445
    %v1164 = vadd.s32 %v1160, 3
    %v1165 = vand.u32 %v1164, 3
    %vm1166 = vcmp.lt.s32.totalorder %v1165, 2
    %vm1167 = vcmp.eq.s32.totalorder %v1165, 0
    %v1168 = vxor.u32 %v1162, 2147483648
    %v1169 = vsel %vm1167, %v1161, %v1168
    %vm1170 = vcmp.eq.s32.totalorder %v1165, 2
    %v1171 = vxor.u32 %v1161, 2147483648
    %v1172 = vsel %vm1170, %v1171, %v1162
    %v1173 = vsel %vm1166, %v1169, %v1172
    %v1174 = vsel %vm1163, nan, %v1173
    %v1175 = vand.u32 2147483647, %v446
    %vm1176 = vcmp.le.f32.partialorder %v1175, 0.7853982
    %vm1177 = vcmp.lt.s32.totalorder %v446, 0
    %v1178 = vand.u32 %v446, 2139095040
    %v1179 = vshrl.u32 %v1178, 23
    %v1180 = vsub.s32 %v1179, 127
    %v1181 = vand.u32 2147483647, %v446
    %v1182 = vand.u32 %v1181, 8388607
    %v1183 = vor.u32 %v1182, 8388608
    %v1184 = vsub.s32 0, %v1183
    %v1185 = vadd.s32 %v1180, 1
    %vm1186 = vcmp.gt.s32.totalorder %v1185, 0
    %v1187 = vsel %vm1186, %v1185, 0
    %v1188 = vshrl.u32 %v1187, 5
    %v1189 = vand.u32 %v1187, 31
    %v1190 = vsub.s32 32, %v1189
    %v1191 = vshrl.u32 683565275, %v1190
    %v1192 = vshll.u32 683565275, %v1189
    %v1193 = vshrl.u32 2475754826, %v1190
    %v1194 = vor.u32 %v1192, %v1193
    %v1195 = vshll.u32 2475754826, %v1189
    %v1196 = vshrl.u32 2131351028, %v1190
    %v1197 = vor.u32 %v1195, %v1196
    %v1198 = vshll.u32 2131351028, %v1189
    %v1199 = vshrl.u32 2102212464, %v1190
    %v1200 = vor.u32 %v1198, %v1199
    %v1201 = vshll.u32 2102212464, %v1189
    %v1202 = vshrl.u32 920167782, %v1190
    %v1203 = vor.u32 %v1201, %v1202
    %v1204 = vshll.u32 920167782, %v1189
    %v1205 = vshrl.u32 1326507024, %v1190
    %v1206 = vor.u32 %v1204, %v1205
    %vm1207 = vcmp.lt.s32.totalorder %v1188, 1
    %vm1208 = vcmp.lt.s32.totalorder %v1188, 2
    %vm1209 = vcmp.lt.s32.totalorder %v1188, 3
    %vm1210 = vcmp.lt.s32.totalorder %v1188, 4
    %v1211 = vsel %vm1207, %v1191, %v1194
    %v1212 = vsel %vm1210, %v1200, 2102212464
    %v1213 = vsel %vm1209, %v1197, %v1212
    %v1214 = vsel %vm1208, %v1211, %v1213
    %v1215 = vsel %vm1207, %v1194, %v1197
    %v1216 = vsel %vm1210, %v1203, 920167782
    %v1217 = vsel %vm1209, %v1200, %v1216
    %v1218 = vsel %vm1208, %v1215, %v1217
    %v1219 = vsel %vm1207, %v1197, %v1200
    %v1220 = vsel %vm1210, %v1206, 1326507024
    %v1221 = vsel %vm1209, %v1203, %v1220
    %v1222 = vsel %vm1208, %v1219, %v1221
    %v1223 = vshll.u32 %v1183, 8
    %v1224 = vmul.u32.u64.compose %v1223, %v1222
    %v1225 = vextract.low.u32 %v1224
    %v1226 = vextract.high.u32 %v1224
    %v1227 = vmul.u32.u64.compose %v1223, %v1218
    %v1228 = vextract.low.u32 %v1227
    %v1229 = vextract.high.u32 %v1227
    %v1230 = vmul.u32 %v1223, %v1214
    %v1231 = vadd.s32 %v1226, %v1228
    %vm1232 = vc.u32 %v1226, %v1228
    %v1233 = vadd.s32 %v1229, 1
    %v1234 = vsel %vm1232, %v1233, %v1229
    %v1235 = vadd.s32 %v1230, %v1234
    %v1236 = vadd.s32 %v1235, 536870912
    %v1237 = vshrl.u32 %v1236, 30
    %v1238 = vshll.u32 %v1237, 30
    %v1239 = vsub.s32 %v1235, %v1238
    %vm1240 = vcmp.lt.s32.totalorder %v1239, 0
    %v1241 = vsub.s32 0, %v1239
    %v1242 = vsel %vm1240, %v1241, %v1239
    %v1243 = vclz %v1242
    %v1244 = vsub.s32 %v1243, 2
    %vm1245 = vcmp.gt.s32.totalorder 0, %v1244
    %v1246 = vsel %vm1245, 0, %v1244
    %v1247 = vsub.s32 32, %v1246
    %v1248 = vshll.u32 %v1239, %v1246
    %v1249 = vshrl.u32 %v1231, %v1247
    %v1250 = vor.u32 %v1248, %v1249
    %v1251 = vsub.s32 4294967266, %v1246
    %v1252 = vadd.s32 %v1251, 127
    %v1253 = vshll.u32 %v1252, 23
    %v1254 = vor.u32 4788187, %v1253
    %v1255 = vand.u32 2147483647, %v1254
    %v1257 = vcvt.s32.f32 %v1250
    %v1258 = vmul.f32 %v1257, %v1255
    %v1259 = vxor.u32 %v1258, 2147483648
    %v1260 = vsel %vm1177, %v1259, %v1258
    %v1261 = vsub.s32 4, %v1237
    %v1262 = vsel %vm1177, %v1261, %v1237
    %v1263 = vsel %vm1176, %v446, %v1260
    %v1264 = vsel %vm1176, 0, %v1262
    %v1265 = vcosq.f32.pop %v1263
    %v1266 = vsinq.f32.pop %v1263
    %vm1267 = vweird.f32 %v446
    %v1268 = vadd.s32 %v1264, 3
    %v1269 = vand.u32 %v1268, 3
    %vm1270 = vcmp.lt.s32.totalorder %v1269, 2
    %vm1271 = vcmp.eq.s32.totalorder %v1269, 0
    %v1272 = vxor.u32 %v1266, 2147483648
    %v1273 = vsel %vm1271, %v1265, %v1272
    %vm1274 = vcmp.eq.s32.totalorder %v1269, 2
    %v1275 = vxor.u32 %v1265, 2147483648
    %v1276 = vsel %vm1274, %v1275, %v1266
    %v1277 = vsel %vm1270, %v1273, %v1276
    %v1278 = vsel %vm1267, nan, %v1277
    %v1287 = vcombine.low %v550, %v654
    %v1288 = vcombine.low %v758, %v862
    %v1290 = vunpack.c.l.s4 1983009808
    %v1291 = vunpack.c.0.s8 %v1290
    %v1292 = vlaneseq
    %v1293 = vshrl.u32 %v1292, 7
    %v1294 = vsub.s32 %v1291, %v1293
    %v1295 = vrot.slane %v1287, %v1294
    %v1297 = vunpack.c.l.s4 1983009808
    %v1298 = vunpack.c.0.s8 %v1297
    %v1299 = vlaneseq
    %v1300 = vshrl.u32 %v1299, 7
    %v1301 = vsub.s32 %v1298, %v1300
    %v1302 = vrot.slane %v1288, %v1301
    %v1303 = vcombine.low %v1295, %v1302
    %v1304 = vcombine.low %v966, %v1070
    %v1305 = vcombine.low %v1174, %v1278
    %v1307 = vunpack.c.l.s4 1983009808
    %v1308 = vunpack.c.0.s8 %v1307
    %v1309 = vlaneseq
    %v1310 = vshrl.u32 %v1309, 7
    %v1311 = vsub.s32 %v1308, %v1310
    %v1312 = vrot.slane %v1304, %v1311
    %v1314 = vunpack.c.l.s4 1983009808
    %v1315 = vunpack.c.0.s8 %v1314
    %v1316 = vlaneseq
    %v1317 = vshrl.u32 %v1316, 7
    %v1318 = vsub.s32 %v1315, %v1317
    %v1319 = vrot.slane %v1305, %v1318
    %v1320 = vcombine.low %v1312, %v1319
    %1323 = vst [vmem:[#allocation7] sm:$0xff] %v1303
    %1324 = vst [vmem:[#allocation7 + $0x8] sm:$0xff] %v1320
    // Predicated region
    $region18: #{tpu_custom_call.1} parent=1 // pred_check
      _
    $region19: #{tpu_custom_call.1} parent=1 // pred_check_branch
      %1326 = sbr.rel (0) target = $region21
    $region20: #{tpu_custom_call.1} parent=1 // pred_region
      %s1328 = ssub.s32 256, 256
      %1329 = vsyncadd [#allocation4], %s1328
      %s1331 = sshll.u32 [#allocation7], 4
      %s1332 = int_to_ptr.vmem [resolvable:$true] %s1331
      %1334 = dma.vmem_to_hbm [thread:$0]  %s1332, 256, %s2, [#allocation4]
    $region21: #{tpu_custom_call.1} parent=1 // pred_fallthru
      _
    // Predicated region
    $region22: #{tpu_custom_call.1} parent=1 // pred_check
      _
    $region23: #{tpu_custom_call.1} parent=1 // pred_check_branch
      %1336 = sbr.rel (0) target = $region25
    $region24: #{tpu_custom_call.1} parent=1 // pred_region
      %1337 = dma.done [#allocation4], 256
    $region25: #{tpu_custom_call.1} parent=1 // pred_fallthru
      _
    %1338 = vsyncpa [#allocation3], 1
    %1339 = vsyncpa [#allocation6], 1
    %1340 = vsyncpa [#allocation4], 1

</llo_original>
